<compile_context>
chip_gen: v6e
topology: v6e:2x2x1
jax: 0.10.0
libtpu: 0.0.40
codegen_flags: <defaults>
</compile_context>

<pallas_src>
import functools

import jax
import jax.numpy as jnp
from jax import lax
from jax.experimental import pallas as pl
from jax.experimental.pallas import tpu as pltpu

D = 128  # feature dim (matches nn.Linear(128, 128) in the module)


def _pick_time_block(total_t, n, max_rows=8192):
    """Largest divisor TB of total_t with TB*N rows <= max_rows (~4 MiB f32)."""
    tb = max(1, min(total_t, max_rows // max(n, 1)))
    while total_t % tb:
        tb -= 1
    return tb


def _lif_residue_kernel(x_ref, wt_ref, b_ref, mem0_ref, res0_ref,
                        o_ref, memf_ref, resf_ref,
                        alpha_sc, mem_sc, res_sc,
                        *, tb, n, tau, thresh):
    """One grid step == one block of TB consecutive LIF time steps.

    x_ref / o_ref / alpha_sc : (TB*N, D)   lane-dense time-block tiles
    wt_ref                   : (D, D)      W_a^T, resident across the grid
    b_ref                    : (1, D)
    mem0/res0, memf/resf     : (N, D)
    mem_sc / res_sc          : (N, D)      carried state (VMEM scratch)
    """
    blk = pl.program_id(0)

    @pl.when(blk == 0)
    def _init():
        mem_sc[...] = mem0_ref[...]
        res_sc[...] = res0_ref[...]

    # --- hoisted alpha: one batched (TB*N, D) @ (D, D) MXU matmul per block,
    #     bias folded into the epilogue, result parked in VMEM scratch. ---
    logits = jnp.dot(x_ref[...].astype(wt_ref.dtype), wt_ref[...],
                     preferred_element_type=jnp.float32)
    alpha_sc[...] = jax.nn.sigmoid(logits + b_ref[...])

    tau_f = jnp.float32(tau)
    thresh_f = jnp.float32(thresh)
    keep_f = jnp.float32(1.0 - thresh)   # compile-time constant

    def step(t, carry):
        mem, res = carry
        row = pl.multiple_of(t * n, n)                 # aligned sublane slice
        x_t = x_ref[pl.ds(row, n), :]
        # mem = tau * mem + x[t]
        mem = tau_f * mem + x_t
        fired = mem >= thresh_f                        # ZIF.forward
        # spike_residue = alpha * spike_residue + spike   (spike = fired*thresh)
        res = alpha_sc[pl.ds(row, n), :] * res + jnp.where(fired, thresh_f, 0.0)
        # soft reset: mem * (1 - spike)
        mem = jnp.where(fired, mem * keep_f, mem)
        o_ref[pl.ds(row, n), :] = res.astype(o_ref.dtype)
        return mem, res

    mem, res = lax.fori_loop(0, tb, step, (mem_sc[...], res_sc[...]),
                             unroll=min(tb, 8))
    mem_sc[...] = mem
    res_sc[...] = res

    # Final-state stores only once, on the last time block.
    @pl.when(blk == pl.num_programs(0) - 1)
    def _final():
        memf_ref[...] = mem
        resf_ref[...] = res


def lif_residue_forward(x2d, w_t, b_row, mem0, res0, *, total_t, n, tau, thresh,
                        tb=None):
    """Run the full total_t-step LIF recurrence.

    x2d: (total_t * n, D) with rows ordered (t, n) row-major.
    Returns (out (total_t*n, D), final_mem (n, D), final_spike_residue (n, D)).
    """
    d = x2d.shape[-1]
    if tb is None:
        tb = _pick_time_block(total_t, n)
    nblk = total_t // tb

    kernel = functools.partial(_lif_residue_kernel, tb=tb, n=n,
                               tau=float(tau), thresh=float(thresh))
    out, memf, resf = pl.pallas_call(
        kernel,
        out_shape=(
            jax.ShapeDtypeStruct((total_t * n, d), jnp.float32),
            jax.ShapeDtypeStruct((n, d), jnp.float32),
            jax.ShapeDtypeStruct((n, d), jnp.float32),
        ),
        grid_spec=pltpu.PrefetchScalarGridSpec(
            num_scalar_prefetch=0,
            grid=(nblk,),
            in_specs=[
                pl.BlockSpec((tb * n, d), lambda i: (i, 0)),   # x time-block
                pl.BlockSpec((d, d), lambda i: (0, 0)),        # W_a^T (resident)
                pl.BlockSpec((1, d), lambda i: (0, 0)),        # b_a
                pl.BlockSpec((n, d), lambda i: (0, 0)),        # mem init
                pl.BlockSpec((n, d), lambda i: (0, 0)),        # residue init
            ],
            out_specs=(
                pl.BlockSpec((tb * n, d), lambda i: (i, 0)),   # spike_residue
                pl.BlockSpec((n, d), lambda i: (0, 0)),        # final mem
                pl.BlockSpec((n, d), lambda i: (0, 0)),        # final residue
            ),
            scratch_shapes=[
                pltpu.VMEM((tb * n, d), jnp.float32),   # alpha for the block
                pltpu.VMEM((n, d), jnp.float32),        # carried mem
                pltpu.VMEM((n, d), jnp.float32),        # carried spike_residue
            ],
        ),
        compiler_params=pltpu.CompilerParams(
            dimension_semantics=("arbitrary",)),   # sequential recurrence over T
    )(x2d, w_t, b_row, mem0, res0)
    return out, memf, resf


class LIFResidueLearn:
    """JAX/Pallas re-implementation of LIF_residue_learn.forward (inference)."""

    def __init__(self, T, thresh=1.0, tau=1.0, gama=1.0, key=None,
                 matmul_dtype=jnp.float32):
        self.T = T
        self.thresh = float(thresh)
        self.tau = float(tau)
        self.gama = float(gama)  # only used by ZIF backward (surrogate grad)
        if key is None:
            key = jax.random.PRNGKey(0)
        kw, kb, kw2, kb2 = jax.random.split(key, 4)
        bound = 1.0 / jnp.sqrt(jnp.float32(D))
        # nn.Linear(128, 128) default init: U(-1/sqrt(in), 1/sqrt(in))
        self.W_a = jax.random.uniform(kw, (D, D), jnp.float32, -bound, bound)
        self.b_a = jax.random.uniform(kb, (D,), jnp.float32, -bound, bound)
        # W_b exists in the PyTorch module but is unused in forward.
        self.W_b = jax.random.uniform(kw2, (D, D), jnp.float32, -bound, bound)
        self.b_b = jax.random.uniform(kb2, (D,), jnp.float32, -bound, bound)
        # Pre-transposed / pre-cast matmul operands (bf16 on v6e/v7x is free
        # accuracy-wise through the sigmoid; recurrence state stays f32).
        self.w_t = self.W_a.T.astype(matmul_dtype)
        self.b_row = self.b_a.reshape(1, D)
        self.current_mem = None
        self.current_spike_residue = None

    def _run(self, x_flat, total_t, n, mem0, res0):
        out, memf, resf = lif_residue_forward(
            x_flat, self.w_t, self.b_row, mem0, res0,
            total_t=total_t, n=n, tau=self.tau, thresh=self.thresh)
        self.current_mem = memf
        self.current_spike_residue = resf
        return out

    def __call__(self, x, mem=None, spike_residue=None):
        if x.ndim == 3:
            # Episodic path: x is (steps, T*N, D); the recurrence over
            # (step, t) is one contiguous chain, so fold it into a single
            # pallas_call of steps*T time steps (state stays in VMEM).
            steps, TN, Dd = x.shape
            N = TN // self.T
            if mem is None:
                mem = jnp.zeros((N, Dd), jnp.float32)
                spike_residue = jnp.zeros((N, Dd), jnp.float32)
            x_flat = x.reshape(steps * self.T * N, Dd)
            out = self._run(x_flat, steps * self.T, N, mem, spike_residue)
            return out.reshape(steps, TN, Dd)
        else:
            TN, Dd = x.shape
            N = TN // self.T
            if mem is None:
                mem = jnp.zeros((N, Dd), jnp.float32)
                spike_residue = jnp.zeros((N, Dd), jnp.float32)
            return self._run(x, self.T, N, mem, spike_residue)


# ----------------------------- pure-JAX references ---------------------------

def _reference_forward(x, W_a, b_a, T, tau, thresh, mem=None, res=None):
    """Mirrors the PyTorch forward (2D path). Returns (out, mem, res)."""
    TN, Dd = x.shape
    N = TN // T
    xt = x.reshape(T, N, Dd)
    if mem is None:
        mem = jnp.zeros((N, Dd), jnp.float32)
        res = jnp.zeros((N, Dd), jnp.float32)
    outs = []
    for t in range(T):
        mem = tau * mem + xt[t]
        alpha = jax.nn.sigmoid(xt[t] @ W_a.T + b_a)
        spike = (mem - thresh >= 0.0).astype(jnp.float32) * thresh
        res = alpha * res + spike
        mem = mem * (1.0 - spike)
        outs.append(res)
    return jnp.stack(outs, 0).reshape(TN, Dd), mem, res


def _reference_forward_3d(x3, W_a, b_a, T, tau, thresh):
    steps = x3.shape[0]
    mem = res = None
    outs = []
    for s in range(steps):
        o, mem, res = _reference_forward(x3[s], W_a, b_a, T, tau, thresh, mem, res)
        outs.append(o)
    return jnp.stack(outs, 0), mem, res


if __name__ == "__main__":
    T, N = 4, 8            # time steps, batch rows per step (N multiple of 8)
    key = jax.random.PRNGKey(0)
    k_mod, k_x2, k_x3 = jax.random.split(key, 3)

    lif = LIFResidueLearn(T=T, thresh=1.0, tau=1.0, gama=1.0, key=k_mod)

    # 2D path: x is (T*N, 128)
    x2d = jax.random.normal(k_x2, (T * N, D), jnp.float32) * 1.5
    y2d = jax.block_until_ready(lif(x2d))

    y_ref, mem_ref, res_ref = _reference_forward(
        x2d, lif.W_a, lif.b_a, T, lif.tau, lif.thresh)
    assert jnp.allclose(y2d, y_ref, rtol=1e-5, atol=1e-5)
    assert jnp.allclose(lif.current_mem, mem_ref, rtol=1e-5, atol=1e-5)
    assert jnp.allclose(lif.current_spike_residue, res_ref, rtol=1e-5, atol=1e-5)

    # 3D (episodic) path: x is (steps, T*N, 128); state carried across steps,
    # now a single pallas_call over steps*T time steps.
    steps = 2
    x3d = jax.random.normal(k_x3, (steps, T * N, D), jnp.float32) * 1.5
    y3d = jax.block_until_ready(lif(x3d))
    y3_ref, mem3_ref, res3_ref = _reference_forward_3d(
        x3d, lif.W_a, lif.b_a, T, lif.tau, lif.thresh)
    assert y3d.shape == (steps, T * N, D)
    assert jnp.allclose(y3d, y3_ref, rtol=1e-5, atol=1e-5)
    assert jnp.allclose(lif.current_mem, mem3_ref, rtol=1e-5, atol=1e-5)
    assert jnp.allclose(lif.current_spike_residue, res3_ref, rtol=1e-5, atol=1e-5)

    # bf16 matmul path (MXU-native on v6e/v7x); recurrence state stays f32.
    lif_bf16 = LIFResidueLearn(T=T, thresh=1.0, tau=1.0, gama=1.0, key=k_mod,
                               matmul_dtype=jnp.bfloat16)
    y_bf16 = jax.block_until_ready(lif_bf16(x2d))
    assert jnp.allclose(y_bf16, y_ref, rtol=5e-2, atol=5e-2)

    print("KERNEL_OK")
</pallas_src>

<mosaic_0001>
module attributes {stable_mosaic.version = 11 : i64} {
  func.func @_lif_residue_kernel(%arg0: i32, %arg1: memref<32x128xf32, #tpu.memory_space<vmem>>, %arg2: memref<128x128xf32, #tpu.memory_space<vmem>>, %arg3: memref<1x128xf32, #tpu.memory_space<vmem>>, %arg4: memref<8x128xf32, #tpu.memory_space<vmem>>, %arg5: memref<8x128xf32, #tpu.memory_space<vmem>>, %arg6: memref<32x128xf32, #tpu.memory_space<vmem>>, %arg7: memref<8x128xf32, #tpu.memory_space<vmem>>, %arg8: memref<8x128xf32, #tpu.memory_space<vmem>>, %arg9: memref<32x128xf32, #tpu.memory_space<vmem>>, %arg10: memref<8x128xf32, #tpu.memory_space<vmem>>, %arg11: memref<8x128xf32, #tpu.memory_space<vmem>>) attributes {dimension_semantics = [#tpu.dimension_semantics<arbitrary>], iteration_bounds = array<i64: 1>, scalar_prefetch = 0 : i64, scratch_operands = 3 : i64, tpu.core_type = #tpu.core_type<tc>, window_params = [{transform_indices = @transform_0, window_bounds = array<i64: 32, 128>}, {pipeline_mode = #tpu.pipeline_mode<synchronous>, transform_indices = @transform_1, window_bounds = array<i64: 128, 128>}, {pipeline_mode = #tpu.pipeline_mode<synchronous>, transform_indices = @transform_2, window_bounds = array<i64: 1, 128>}, {pipeline_mode = #tpu.pipeline_mode<synchronous>, transform_indices = @transform_3, window_bounds = array<i64: 8, 128>}, {pipeline_mode = #tpu.pipeline_mode<synchronous>, transform_indices = @transform_4, window_bounds = array<i64: 8, 128>}, {transform_indices = @transform_5, window_bounds = array<i64: 32, 128>}, {pipeline_mode = #tpu.pipeline_mode<synchronous>, transform_indices = @transform_6, window_bounds = array<i64: 8, 128>}, {pipeline_mode = #tpu.pipeline_mode<synchronous>, transform_indices = @transform_7, window_bounds = array<i64: 8, 128>}]} {
    %c0_i32 = arith.constant 0 : i32
    %0 = arith.cmpi eq, %arg0, %c0_i32 : i32
    %1 = arith.extui %0 : i1 to i32
    %c0_i32_0 = arith.constant 0 : i32
    %2 = arith.cmpi ne, %1, %c0_i32_0 : i32
    scf.if %2 {
      %c0_42 = arith.constant 0 : index
      %c0_43 = arith.constant 0 : index
      %106 = vector.load %arg4[%c0_42, %c0_43] : memref<8x128xf32, #tpu.memory_space<vmem>>, vector<8x128xf32>
      %c0_44 = arith.constant 0 : index
      %c0_45 = arith.constant 0 : index
      %107 = vector.load %arg10[%c0_44, %c0_45] : memref<8x128xf32, #tpu.memory_space<vmem>>, vector<8x128xf32>
      tpu.vector_store %arg10[%c0_44, %c0_45], %106 {strides = array<i32>} : memref<8x128xf32, #tpu.memory_space<vmem>>, vector<8x128xf32>,
      %c0_46 = arith.constant 0 : index
      %c0_47 = arith.constant 0 : index
      %108 = vector.load %arg5[%c0_46, %c0_47] : memref<8x128xf32, #tpu.memory_space<vmem>>, vector<8x128xf32>
      %c0_48 = arith.constant 0 : index
      %c0_49 = arith.constant 0 : index
      %109 = vector.load %arg11[%c0_48, %c0_49] : memref<8x128xf32, #tpu.memory_space<vmem>>, vector<8x128xf32>
      tpu.vector_store %arg11[%c0_48, %c0_49], %108 {strides = array<i32>} : memref<8x128xf32, #tpu.memory_space<vmem>>, vector<8x128xf32>,
    } else {
    }
    %c0 = arith.constant 0 : index
    %c0_1 = arith.constant 0 : index
    %3 = vector.load %arg1[%c0, %c0_1] : memref<32x128xf32, #tpu.memory_space<vmem>>, vector<32x128xf32>
    %c0_2 = arith.constant 0 : index
    %c0_3 = arith.constant 0 : index
    %4 = vector.load %arg2[%c0_2, %c0_3] : memref<128x128xf32, #tpu.memory_space<vmem>>, vector<128x128xf32>
    %cst = arith.constant dense<0.000000e+00> : vector<32x128xf32>
    %5 = tpu.matmul %3, %4, %cst {dimension_numbers = #tpu.dot_dimension_numbers<[1], [0], [0], [1], [0, 0, 1, 1], [], []>} : vector<32x128xf32>, vector<128x128xf32>, vector<32x128xf32> -> vector<32x128xf32>
    %c0_4 = arith.constant 0 : index
    %c0_5 = arith.constant 0 : index
    %6 = vector.load %arg3[%c0_4, %c0_5] : memref<1x128xf32, #tpu.memory_space<vmem>>, vector<1x128xf32>
    %7 = vector.broadcast %6 : vector<1x128xf32> to vector<32x128xf32>
    %8 = arith.addf %5, %7 : vector<32x128xf32>
    %9 = arith.negf %8 : vector<32x128xf32>
    %10 = math.exp %9 : vector<32x128xf32>
    %cst_6 = arith.constant 1.000000e+00 : f32
    %11 = vector.broadcast %cst_6 : f32 to vector<32x128xf32>
    %12 = arith.addf %11, %10 : vector<32x128xf32>
    %13 = arith.divf %11, %12 : vector<32x128xf32>
    %c0_7 = arith.constant 0 : index
    %c0_8 = arith.constant 0 : index
    %14 = vector.load %arg9[%c0_7, %c0_8] : memref<32x128xf32, #tpu.memory_space<vmem>>, vector<32x128xf32>
    tpu.vector_store %arg9[%c0_7, %c0_8], %13 {strides = array<i32>} : memref<32x128xf32, #tpu.memory_space<vmem>>, vector<32x128xf32>,
    %c0_9 = arith.constant 0 : index
    %c0_10 = arith.constant 0 : index
    %15 = vector.load %arg10[%c0_9, %c0_10] : memref<8x128xf32, #tpu.memory_space<vmem>>, vector<8x128xf32>
    %c0_11 = arith.constant 0 : index
    %c0_12 = arith.constant 0 : index
    %16 = vector.load %arg11[%c0_11, %c0_12] : memref<8x128xf32, #tpu.memory_space<vmem>>, vector<8x128xf32>
    %cst_13 = arith.constant 1.000000e+00 : f32
    %cst_14 = arith.constant 1.000000e+00 : f32
    %cst_15 = arith.constant 0.000000e+00 : f32
    %c0_i32_16 = arith.constant 0 : i32
    %c8_i32 = arith.constant 8 : i32
    %17 = arith.muli %c0_i32_16, %c8_i32 : i32
    %18 = tpu.assume_multiple %17, 8 : i32
    %19 = arith.index_cast %18 : i32 to index
    %c0_17 = arith.constant 0 : index
    %20 = vector.load %arg1[%19, %c0_17] : memref<32x128xf32, #tpu.memory_space<vmem>>, vector<8x128xf32>
    %21 = vector.broadcast %cst_13 : f32 to vector<8x128xf32>
    %22 = arith.mulf %21, %15 : vector<8x128xf32>
    %23 = arith.addf %22, %20 : vector<8x128xf32>
    %24 = vector.broadcast %cst_14 : f32 to vector<8x128xf32>
    %25 = arith.cmpf oge, %23, %24 : vector<8x128xf32>
    %26 = arith.index_cast %18 : i32 to index
    %c0_18 = arith.constant 0 : index
    %27 = vector.load %arg9[%26, %c0_18] : memref<32x128xf32, #tpu.memory_space<vmem>>, vector<8x128xf32>
    %28 = arith.mulf %27, %16 : vector<8x128xf32>
    %cst_19 = arith.constant 0.000000e+00 : f32
    %29 = vector.broadcast %cst_14 : f32 to vector<8x128xf32>
    %30 = vector.broadcast %cst_19 : f32 to vector<8x128xf32>
    %31 = arith.select %25, %29, %30 : vector<8x128xi1>, vector<8x128xf32>
    %32 = arith.addf %28, %31 : vector<8x128xf32>
    %33 = vector.broadcast %cst_15 : f32 to vector<8x128xf32>
    %34 = arith.mulf %23, %33 : vector<8x128xf32>
    %35 = arith.select %25, %34, %23 : vector<8x128xi1>, vector<8x128xf32>
    %36 = arith.index_cast %18 : i32 to index
    %c0_20 = arith.constant 0 : index
    %37 = vector.load %arg6[%36, %c0_20] : memref<32x128xf32, #tpu.memory_space<vmem>>, vector<8x128xf32>
    tpu.vector_store %arg6[%36, %c0_20], %32 {strides = array<i32>} : memref<32x128xf32, #tpu.memory_space<vmem>>, vector<8x128xf32>,
    %c1_i32 = arith.constant 1 : i32
    %c8_i32_21 = arith.constant 8 : i32
    %38 = arith.muli %c1_i32, %c8_i32_21 : i32
    %39 = tpu.assume_multiple %38, 8 : i32
    %40 = arith.index_cast %39 : i32 to index
    %c0_22 = arith.constant 0 : index
    %41 = vector.load %arg1[%40, %c0_22] : memref<32x128xf32, #tpu.memory_space<vmem>>, vector<8x128xf32>
    %42 = vector.broadcast %cst_13 : f32 to vector<8x128xf32>
    %43 = arith.mulf %42, %35 : vector<8x128xf32>
    %44 = arith.addf %43, %41 : vector<8x128xf32>
    %45 = vector.broadcast %cst_14 : f32 to vector<8x128xf32>
    %46 = arith.cmpf oge, %44, %45 : vector<8x128xf32>
    %47 = arith.index_cast %39 : i32 to index
    %c0_23 = arith.constant 0 : index
    %48 = vector.load %arg9[%47, %c0_23] : memref<32x128xf32, #tpu.memory_space<vmem>>, vector<8x128xf32>
    %49 = arith.mulf %48, %32 : vector<8x128xf32>
    %cst_24 = arith.constant 0.000000e+00 : f32
    %50 = vector.broadcast %cst_14 : f32 to vector<8x128xf32>
    %51 = vector.broadcast %cst_24 : f32 to vector<8x128xf32>
    %52 = arith.select %46, %50, %51 : vector<8x128xi1>, vector<8x128xf32>
    %53 = arith.addf %49, %52 : vector<8x128xf32>
    %54 = vector.broadcast %cst_15 : f32 to vector<8x128xf32>
    %55 = arith.mulf %44, %54 : vector<8x128xf32>
    %56 = arith.select %46, %55, %44 : vector<8x128xi1>, vector<8x128xf32>
    %57 = arith.index_cast %39 : i32 to index
    %c0_25 = arith.constant 0 : index
    %58 = vector.load %arg6[%57, %c0_25] : memref<32x128xf32, #tpu.memory_space<vmem>>, vector<8x128xf32>
    tpu.vector_store %arg6[%57, %c0_25], %53 {strides = array<i32>} : memref<32x128xf32, #tpu.memory_space<vmem>>, vector<8x128xf32>,
    %c2_i32 = arith.constant 2 : i32
    %c8_i32_26 = arith.constant 8 : i32
    %59 = arith.muli %c2_i32, %c8_i32_26 : i32
    %60 = tpu.assume_multiple %59, 8 : i32
    %61 = arith.index_cast %60 : i32 to index
    %c0_27 = arith.constant 0 : index
    %62 = vector.load %arg1[%61, %c0_27] : memref<32x128xf32, #tpu.memory_space<vmem>>, vector<8x128xf32>
    %63 = vector.broadcast %cst_13 : f32 to vector<8x128xf32>
    %64 = arith.mulf %63, %56 : vector<8x128xf32>
    %65 = arith.addf %64, %62 : vector<8x128xf32>
    %66 = vector.broadcast %cst_14 : f32 to vector<8x128xf32>
    %67 = arith.cmpf oge, %65, %66 : vector<8x128xf32>
    %68 = arith.index_cast %60 : i32 to index
    %c0_28 = arith.constant 0 : index
    %69 = vector.load %arg9[%68, %c0_28] : memref<32x128xf32, #tpu.memory_space<vmem>>, vector<8x128xf32>
    %70 = arith.mulf %69, %53 : vector<8x128xf32>
    %cst_29 = arith.constant 0.000000e+00 : f32
    %71 = vector.broadcast %cst_14 : f32 to vector<8x128xf32>
    %72 = vector.broadcast %cst_29 : f32 to vector<8x128xf32>
    %73 = arith.select %67, %71, %72 : vector<8x128xi1>, vector<8x128xf32>
    %74 = arith.addf %70, %73 : vector<8x128xf32>
    %75 = vector.broadcast %cst_15 : f32 to vector<8x128xf32>
    %76 = arith.mulf %65, %75 : vector<8x128xf32>
    %77 = arith.select %67, %76, %65 : vector<8x128xi1>, vector<8x128xf32>
    %78 = arith.index_cast %60 : i32 to index
    %c0_30 = arith.constant 0 : index
    %79 = vector.load %arg6[%78, %c0_30] : memref<32x128xf32, #tpu.memory_space<vmem>>, vector<8x128xf32>
    tpu.vector_store %arg6[%78, %c0_30], %74 {strides = array<i32>} : memref<32x128xf32, #tpu.memory_space<vmem>>, vector<8x128xf32>,
    %c3_i32 = arith.constant 3 : i32
    %c8_i32_31 = arith.constant 8 : i32
    %80 = arith.muli %c3_i32, %c8_i32_31 : i32
    %81 = tpu.assume_multiple %80, 8 : i32
    %82 = arith.index_cast %81 : i32 to index
    %c0_32 = arith.constant 0 : index
    %83 = vector.load %arg1[%82, %c0_32] : memref<32x128xf32, #tpu.memory_space<vmem>>, vector<8x128xf32>
    %84 = vector.broadcast %cst_13 : f32 to vector<8x128xf32>
    %85 = arith.mulf %84, %77 : vector<8x128xf32>
    %86 = arith.addf %85, %83 : vector<8x128xf32>
    %87 = vector.broadcast %cst_14 : f32 to vector<8x128xf32>
    %88 = arith.cmpf oge, %86, %87 : vector<8x128xf32>
    %89 = arith.index_cast %81 : i32 to index
    %c0_33 = arith.constant 0 : index
    %90 = vector.load %arg9[%89, %c0_33] : memref<32x128xf32, #tpu.memory_space<vmem>>, vector<8x128xf32>
    %91 = arith.mulf %90, %74 : vector<8x128xf32>
    %cst_34 = arith.constant 0.000000e+00 : f32
    %92 = vector.broadcast %cst_14 : f32 to vector<8x128xf32>
    %93 = vector.broadcast %cst_34 : f32 to vector<8x128xf32>
    %94 = arith.select %88, %92, %93 : vector<8x128xi1>, vector<8x128xf32>
    %95 = arith.addf %91, %94 : vector<8x128xf32>
    %96 = vector.broadcast %cst_15 : f32 to vector<8x128xf32>
    %97 = arith.mulf %86, %96 : vector<8x128xf32>
    %98 = arith.select %88, %97, %86 : vector<8x128xi1>, vector<8x128xf32>
    %99 = arith.index_cast %81 : i32 to index
    %c0_35 = arith.constant 0 : index
    %100 = vector.load %arg6[%99, %c0_35] : memref<32x128xf32, #tpu.memory_space<vmem>>, vector<8x128xf32>
    tpu.vector_store %arg6[%99, %c0_35], %95 {strides = array<i32>} : memref<32x128xf32, #tpu.memory_space<vmem>>, vector<8x128xf32>,
    %c4_i32 = arith.constant 4 : i32
    %c0_36 = arith.constant 0 : index
    %c0_37 = arith.constant 0 : index
    %101 = vector.load %arg10[%c0_36, %c0_37] : memref<8x128xf32, #tpu.memory_space<vmem>>, vector<8x128xf32>
    tpu.vector_store %arg10[%c0_36, %c0_37], %98 {strides = array<i32>} : memref<8x128xf32, #tpu.memory_space<vmem>>, vector<8x128xf32>,
    %c0_38 = arith.constant 0 : index
    %c0_39 = arith.constant 0 : index
    %102 = vector.load %arg11[%c0_38, %c0_39] : memref<8x128xf32, #tpu.memory_space<vmem>>, vector<8x128xf32>
    tpu.vector_store %arg11[%c0_38, %c0_39], %95 {strides = array<i32>} : memref<8x128xf32, #tpu.memory_space<vmem>>, vector<8x128xf32>,
    %c0_i32_40 = arith.constant 0 : i32
    %103 = arith.cmpi eq, %arg0, %c0_i32_40 : i32
    %104 = arith.extui %103 : i1 to i32
    %c0_i32_41 = arith.constant 0 : i32
    %105 = arith.cmpi ne, %104, %c0_i32_41 : i32
    scf.if %105 {
      %c0_42 = arith.constant 0 : index
      %c0_43 = arith.constant 0 : index
      %106 = vector.load %arg7[%c0_42, %c0_43] : memref<8x128xf32, #tpu.memory_space<vmem>>, vector<8x128xf32>
      tpu.vector_store %arg7[%c0_42, %c0_43], %98 {strides = array<i32>} : memref<8x128xf32, #tpu.memory_space<vmem>>, vector<8x128xf32>,
      %c0_44 = arith.constant 0 : index
      %c0_45 = arith.constant 0 : index
      %107 = vector.load %arg8[%c0_44, %c0_45] : memref<8x128xf32, #tpu.memory_space<vmem>>, vector<8x128xf32>
      tpu.vector_store %arg8[%c0_44, %c0_45], %95 {strides = array<i32>} : memref<8x128xf32, #tpu.memory_space<vmem>>, vector<8x128xf32>,
    } else {
    }
    return
  }
  func.func @transform_0(%arg0: i32) -> (i32, i32) {
    %c0_i32 = arith.constant 0 : i32
    %c0_i32_0 = arith.constant 0 : i32
    return %arg0, %c0_i32 : i32, i32
  }
  func.func @transform_1(%arg0: i32) -> (i32, i32) {
    %c0_i32 = arith.constant 0 : i32
    %c0_i32_0 = arith.constant 0 : i32
    %c0_i32_1 = arith.constant 0 : i32
    return %c0_i32, %c0_i32_0 : i32, i32
  }
  func.func @transform_2(%arg0: i32) -> (i32, i32) {
    %c0_i32 = arith.constant 0 : i32
    %c0_i32_0 = arith.constant 0 : i32
    %c0_i32_1 = arith.constant 0 : i32
    return %c0_i32, %c0_i32_0 : i32, i32
  }
  func.func @transform_3(%arg0: i32) -> (i32, i32) {
    %c0_i32 = arith.constant 0 : i32
    %c0_i32_0 = arith.constant 0 : i32
    %c0_i32_1 = arith.constant 0 : i32
    return %c0_i32, %c0_i32_0 : i32, i32
  }
  func.func @transform_4(%arg0: i32) -> (i32, i32) {
    %c0_i32 = arith.constant 0 : i32
    %c0_i32_0 = arith.constant 0 : i32
    %c0_i32_1 = arith.constant 0 : i32
    return %c0_i32, %c0_i32_0 : i32, i32
  }
  func.func @transform_5(%arg0: i32) -> (i32, i32) {
    %c0_i32 = arith.constant 0 : i32
    %c0_i32_0 = arith.constant 0 : i32
    return %arg0, %c0_i32 : i32, i32
  }
  func.func @transform_6(%arg0: i32) -> (i32, i32) {
    %c0_i32 = arith.constant 0 : i32
    %c0_i32_0 = arith.constant 0 : i32
    %c0_i32_1 = arith.constant 0 : i32
    return %c0_i32, %c0_i32_0 : i32, i32
  }
  func.func @transform_7(%arg0: i32) -> (i32, i32) {
    %c0_i32 = arith.constant 0 : i32
    %c0_i32_0 = arith.constant 0 : i32
    %c0_i32_1 = arith.constant 0 : i32
    return %c0_i32, %c0_i32_0 : i32, i32
  }
}

</mosaic_0001>

<llo_original>
// kernel: tpu_custom_call.1
$region0: #{tpu_custom_call.1}
  #allocation0 [shape = 'u32[]', space=smem, size = 0x4, offset = 0x4, fixed_abs, tag = 'smem constant byte address 0x4 - core index']
  #allocation1 [shape = 'u32[144,128]{1,0:T(1,128)}', space=vmem, size = 0x12000, scoped, tag = 'internal scratch']
  #allocation2 [shape = 'f32[32,128]{1,0:T(8,128)}', space=vmem, size = 0x4000, scoped, tag = 'scratch operand']
  #allocation3 [shape = 'f32[8,128]{1,0:T(8,128)}', space=vmem, size = 0x1000, scoped, tag = 'scratch operand']
  #allocation4 [shape = 'f32[8,128]{1,0:T(8,128)}', space=vmem, size = 0x1000, scoped, tag = 'scratch operand']
  %s0 = inlined_call_operand.hbm [shape: f32[32,128], index: 0, kind: input, shape index: {}]
  %s1 = inlined_call_operand.hbm [shape: f32[128,128], index: 1, kind: input, shape index: {}]
  %s2 = inlined_call_operand.vmem [shape: f32[1,128], index: 2, kind: input, shape index: {}]
  %s3 = inlined_call_operand.hbm [shape: f32[8,128], index: 3, kind: input, shape index: {}]
  %s4 = inlined_call_operand.hbm [shape: f32[8,128], index: 4, kind: input, shape index: {}]
  %s5 = inlined_call_operand.hbm [shape: f32[32,128], index: 5, kind: output, shape index: {0}]
  %s6 = inlined_call_operand.hbm [shape: f32[8,128], index: 6, kind: output, shape index: {1}]
  %s7 = inlined_call_operand.hbm [shape: f32[8,128], index: 7, kind: output, shape index: {2}]
  %8 = xla_tuple %s5, %s6, %s7
  %s9 = sld [smem:[#allocation0]]
  $region70: #{tpu_custom_call.1} parent=0
    _
  %s11 = ssub.s32 1, %s9
  %s12 = scalar_select 0, %s11, %s9
  $region1: #{tpu_custom_call.1} parent=0
    #allocation5 [shape = 'u8[16384]{0}', space=vmem, size = 0x4000, scoped, tag = 'input window, operand 0, single buffered']
    #allocation6 [shape = 's32[1]{0}', space=sflag, size = 0x4, scoped, tag = 'scoped memory for tpu_custom_call.1']
    #allocation7 [shape = 's32[1]{0}', space=sflag, size = 0x4, scoped, tag = 'scoped memory for tpu_custom_call.1']
    #allocation8 [shape = 'u8[65536]{0}', space=vmem, size = 0x10000, scoped, tag = 'input window, operand 1, single buffered']
    #allocation9 [shape = 's32[1]{0}', space=sflag, size = 0x4, scoped, tag = 'scoped memory for tpu_custom_call.1']
    #allocation10 [shape = 'u8[4096]{0}', space=vmem, size = 0x1000, scoped, tag = 'input window, operand 3, single buffered']
    #allocation11 [shape = 'u8[4096]{0}', space=vmem, size = 0x1000, scoped, tag = 'input window, operand 4, single buffered']
    #allocation12 [shape = 's32[1]{0}', space=sflag, size = 0x4, scoped, tag = 'scoped memory for tpu_custom_call.1']
    #allocation13 [shape = 'u8[16384]{0}', space=vmem, size = 0x4000, scoped, tag = 'output window, operand 0, single buffered']
    #allocation14 [shape = 'u8[4096]{0}', space=vmem, size = 0x1000, scoped, tag = 'output window, operand 1, single buffered']
    #allocation15 [shape = 's32[1]{0}', space=sflag, size = 0x4, scoped, tag = 'scoped memory for tpu_custom_call.1']
    #allocation16 [shape = 'u8[4096]{0}', space=vmem, size = 0x1000, scoped, tag = 'output window, operand 2, single buffered']
    %13 = vsyncpa [#allocation6], 0
    %14 = vsyncpa [#allocation9], 0
    %15 = vsyncpa [#allocation12], 0
    %16 = vsyncpa [#allocation7], 0
    %17 = vsyncpa [#allocation15], 0
    // Predicated region
    $region2: #{tpu_custom_call.1} parent=1 // pred_check
      _
    $region3: #{tpu_custom_call.1} parent=1 // pred_check_branch
      %19 = sbr.rel (0) target = $region5
    $region4: #{tpu_custom_call.1} parent=1 // pred_region
      %s21 = ssub.s32 512, 512
      %22 = vsyncadd [#allocation6], %s21
      %s23 = sshll.u32 [#allocation5], 4
      %s24 = int_to_ptr.vmem [resolvable:$true] %s23
      %29 = dma.hbm_to_vmem [thread:$0]  %s0, 512, %s24, [#allocation6], 128, 128, 8
    $region5: #{tpu_custom_call.1} parent=1 // pred_fallthru
      _
    // Predicated region
    $region6: #{tpu_custom_call.1} parent=1 // pred_check
      _
    $region7: #{tpu_custom_call.1} parent=1 // pred_check_branch
      %31 = sbr.rel (0) target = $region9
    $region8: #{tpu_custom_call.1} parent=1 // pred_region
      %s33 = ssub.s32 2048, 2048
      %34 = vsyncadd [#allocation9], %s33
      %s35 = sshll.u32 [#allocation8], 4
      %s36 = int_to_ptr.vmem [resolvable:$true] %s35
      %41 = dma.hbm_to_vmem [thread:$0]  %s1, 2048, %s36, [#allocation9], 128, 128, 8
    $region9: #{tpu_custom_call.1} parent=1 // pred_fallthru
      _
    // Predicated region
    $region10: #{tpu_custom_call.1} parent=1 // pred_check
      _
    $region11: #{tpu_custom_call.1} parent=1 // pred_check_branch
      %43 = sbr.rel (0) target = $region13
    $region12: #{tpu_custom_call.1} parent=1 // pred_region
      _
    $region13: #{tpu_custom_call.1} parent=1 // pred_fallthru
      _
    // Predicated region
    $region14: #{tpu_custom_call.1} parent=1 // pred_check
      _
    $region15: #{tpu_custom_call.1} parent=1 // pred_check_branch
      %45 = sbr.rel (0) target = $region17
    $region16: #{tpu_custom_call.1} parent=1 // pred_region
      %s47 = ssub.s32 128, 128
      %48 = vsyncadd [#allocation9], %s47
      %s50 = sshll.u32 [#allocation10], 4
      %s51 = int_to_ptr.vmem [resolvable:$true] %s50
      %53 = dma.hbm_to_vmem [thread:$0]  %s3, 128, %s51, [#allocation9]
    $region17: #{tpu_custom_call.1} parent=1 // pred_fallthru
      _
    // Predicated region
    $region18: #{tpu_custom_call.1} parent=1 // pred_check
      _
    $region19: #{tpu_custom_call.1} parent=1 // pred_check_branch
      %55 = sbr.rel (0) target = $region21
    $region20: #{tpu_custom_call.1} parent=1 // pred_region
      %s57 = ssub.s32 128, 128
      %58 = vsyncadd [#allocation12], %s57
      %s60 = sshll.u32 [#allocation11], 4
      %s61 = int_to_ptr.vmem [resolvable:$true] %s60
      %63 = dma.hbm_to_vmem [thread:$0]  %s4, 128, %s61, [#allocation12]
    $region21: #{tpu_custom_call.1} parent=1 // pred_fallthru
      _
    // Predicated region
    $region22: #{tpu_custom_call.1} parent=1 // pred_check
      _
    $region23: #{tpu_custom_call.1} parent=1 // pred_check_branch
      %65 = sbr.rel (0) target = $region25
    $region24: #{tpu_custom_call.1} parent=1 // pred_region
      %66 = dma.done [#allocation6], 512
    $region25: #{tpu_custom_call.1} parent=1 // pred_fallthru
      _
    // Predicated region
    $region26: #{tpu_custom_call.1} parent=1 // pred_check
      _
    $region27: #{tpu_custom_call.1} parent=1 // pred_check_branch
      %68 = sbr.rel (0) target = $region29
    $region28: #{tpu_custom_call.1} parent=1 // pred_region
      %69 = dma.done [#allocation9], 2048
    $region29: #{tpu_custom_call.1} parent=1 // pred_fallthru
      _
    // Predicated region
    $region30: #{tpu_custom_call.1} parent=1 // pred_check
      _
    $region31: #{tpu_custom_call.1} parent=1 // pred_check_branch
      %71 = sbr.rel (0) target = $region33
    $region32: #{tpu_custom_call.1} parent=1 // pred_region
      %72 = dma.done [#allocation9], 128
    $region33: #{tpu_custom_call.1} parent=1 // pred_fallthru
      _
    // Predicated region
    $region34: #{tpu_custom_call.1} parent=1 // pred_check
      _
    $region35: #{tpu_custom_call.1} parent=1 // pred_check_branch
      %74 = sbr.rel (0) target = $region37
    $region36: #{tpu_custom_call.1} parent=1 // pred_region
      %75 = dma.done [#allocation12], 128
    $region37: #{tpu_custom_call.1} parent=1 // pred_fallthru
      _
    %p76 = scmp.eq.s32.totalorder 0, 0
    // Predicated region
    $region38: #{tpu_custom_call.1} parent=1 // pred_check
      %p77 = pneg %p76
    $region39: #{tpu_custom_call.1} parent=1 // pred_check_branch
      %79 = sbr.rel (%p77) target = $region41
    $region40: #{tpu_custom_call.1} parent=1 // pred_region
      %v80 = vld [vmem:[#allocation10] sm:$0xff]
      %81 = vst [vmem:[#allocation3] sm:$0xff] %v80
      %v82 = vld [vmem:[#allocation11] sm:$0xff]
      %83 = vst [vmem:[#allocation4] sm:$0xff] %v82
    $region41: #{tpu_custom_call.1} parent=1 // pred_fallthru
      _
    %v84 = vld [vmem:[#allocation5] sm:$0xff]
    %v85 = vld [vmem:[#allocation5 + $0x8] sm:$0xff]
    %v86 = vld [vmem:[#allocation5 + $0x10] sm:$0xff]
    %v87 = vld [vmem:[#allocation5 + $0x18] sm:$0xff]
    %v88 = vld [vmem:[#allocation8] sm:$0xff]
    %v89 = vld [vmem:[#allocation8 + $0x8] sm:$0xff]
    %v90 = vld [vmem:[#allocation8 + $0x10] sm:$0xff]
    %v91 = vld [vmem:[#allocation8 + $0x18] sm:$0xff]
    %v92 = vld [vmem:[#allocation8 + $0x20] sm:$0xff]
    %v93 = vld [vmem:[#allocation8 + $0x28] sm:$0xff]
    %v94 = vld [vmem:[#allocation8 + $0x30] sm:$0xff]
    %v95 = vld [vmem:[#allocation8 + $0x38] sm:$0xff]
    %v96 = vld [vmem:[#allocation8 + $0x40] sm:$0xff]
    %v97 = vld [vmem:[#allocation8 + $0x48] sm:$0xff]
    %v98 = vld [vmem:[#allocation8 + $0x50] sm:$0xff]
    %v99 = vld [vmem:[#allocation8 + $0x58] sm:$0xff]
    %v100 = vld [vmem:[#allocation8 + $0x60] sm:$0xff]
    %v101 = vld [vmem:[#allocation8 + $0x68] sm:$0xff]
    %v102 = vld [vmem:[#allocation8 + $0x70] sm:$0xff]
    %v103 = vld [vmem:[#allocation8 + $0x78] sm:$0xff]
    %v104 = vld [vmem:[%s2] sm:$0x1]
    %v106 = vlaneseq
    %v107 = vshrl.u32 %v106, 7
    %v108 = vsub.s32 0, %v107
    %v109 = vrot.slane %v104, %v108
    %111 = vmatprep.subr.mxu0 0.0
    %112 = vmatpush1.msra.mxu0 %v103
    %113 = vmatprep.subr.mxu0 0.0
    %114 = vmatpush1.msra.mxu0 %v102
    %115 = vmatprep.subr.mxu0 0.0
    %116 = vmatpush1.msra.mxu0 %v101
    %117 = vmatprep.subr.mxu0 0.0
    %118 = vmatpush1.msra.mxu0 %v100
    %119 = vmatprep.subr.mxu0 0.0
    %120 = vmatpush1.msra.mxu0 %v99
    %121 = vmatprep.subr.mxu0 0.0
    %122 = vmatpush1.msra.mxu0 %v98
    %123 = vmatprep.subr.mxu0 0.0
    %124 = vmatpush1.msra.mxu0 %v97
    %125 = vmatprep.subr.mxu0 0.0
    %126 = vmatpush1.msra.mxu0 %v96
    %127 = vmatprep.subr.mxu0 0.0
    %128 = vmatpush1.msra.mxu0 %v95
    %129 = vmatprep.subr.mxu0 0.0
    %130 = vmatpush1.msra.mxu0 %v94
    %131 = vmatprep.subr.mxu0 0.0
    %132 = vmatpush1.msra.mxu0 %v93
    %133 = vmatprep.subr.mxu0 0.0
    %134 = vmatpush1.msra.mxu0 %v92
    %135 = vmatprep.subr.mxu0 0.0
    %136 = vmatpush1.msra.mxu0 %v91
    %137 = vmatprep.subr.mxu0 0.0
    %138 = vmatpush1.msra.mxu0 %v90
    %139 = vmatprep.subr.mxu0 0.0
    %140 = vmatpush1.msra.mxu0 %v89
    %141 = vmatprep.subr.mxu0 0.0
    %142 = vmatpush1.msra.mxu0 %v88
    %143 = vmatprep.subr.mxu0 0.0
    %144 = vmatpush2.msra.mxu0 0.0
    %145 = vmatprep.subr.mxu0 0.0
    %146 = vmatpush2.msra.mxu0 0.0
    %147 = vmatprep.subr.mxu0 0.0
    %148 = vmatpush2.msra.mxu0 0.0
    %149 = vmatprep.subr.mxu0 0.0
    %150 = vmatpush2.msra.mxu0 0.0
    %151 = vmatprep.subr.mxu0 0.0
    %152 = vmatpush2.msra.mxu0 0.0
    %153 = vmatprep.subr.mxu0 0.0
    %154 = vmatpush2.msra.mxu0 0.0
    %155 = vmatprep.subr.mxu0 0.0
    %156 = vmatpush2.msra.mxu0 0.0
    %157 = vmatprep.subr.mxu0 0.0
    %158 = vmatpush2.msra.mxu0 0.0
    %159 = vmatprep.subr.mxu0 0.0
    %160 = vmatpush2.msra.mxu0 0.0
    %161 = vmatprep.subr.mxu0 0.0
    %162 = vmatpush2.msra.mxu0 0.0
    %163 = vmatprep.subr.mxu0 0.0
    %164 = vmatpush2.msra.mxu0 0.0
    %165 = vmatprep.subr.mxu0 0.0
    %166 = vmatpush2.msra.mxu0 0.0
    %167 = vmatprep.subr.mxu0 0.0
    %168 = vmatpush2.msra.mxu0 0.0
    %169 = vmatprep.subr.mxu0 0.0
    %170 = vmatpush2.msra.mxu0 0.0
    %171 = vmatprep.subr.mxu0 0.0
    %172 = vmatpush2.msra.mxu0 0.0
    %173 = vmatprep.subr.mxu0 0.0
    %174 = vmatpush2.msra.mxu0 0.0
    %175 = vmatprep.mubr.f32.mxu0 0.0
    %176 = vmatmul.mubr.f32.gmra.mxu0 %v84
    %v177 = vpop.f32.mrf.mxu0
    %v178 = vadd.f32 %v109, %v177
    %v179 = vpop.f32.mrf.mxu0
    %180 = vmatprep.mubr.f32.mxu0 0.0
    %181 = vmatmul.mubr.f32.gmra.mxu0 %v85
    %v182 = vpop.f32.mrf.mxu0
    %v183 = vadd.f32 %v109, %v182
    %v184 = vpop.f32.mrf.mxu0
    %185 = vmatprep.mubr.f32.mxu0 0.0
    %186 = vmatmul.mubr.f32.gmra.mxu0 %v86
    %v187 = vpop.f32.mrf.mxu0
    %v188 = vadd.f32 %v109, %v187
    %v189 = vpop.f32.mrf.mxu0
    %190 = vmatprep.mubr.f32.mxu0 0.0
    %191 = vmatmul.mubr.f32.gmra.mxu0 %v87
    %v192 = vpop.f32.mrf.mxu0
    %v193 = vadd.f32 %v109, %v192
    %v194 = vpop.f32.mrf.mxu0
    %195 = vdwg.mxu0
    %v196 = vxor.u32 %v178, 2147483648
    %v197 = vxor.u32 %v183, 2147483648
    %v198 = vxor.u32 %v188, 2147483648
    %v199 = vxor.u32 %v193, 2147483648
    %v200 = vmul.f32 %v196, 1.442695
    %v201 = vpow.pop %v200
    %v202 = vmul.f32 %v197, 1.442695
    %v203 = vpow.pop %v202
    %v204 = vmul.f32 %v198, 1.442695
    %v205 = vpow.pop %v204
    %v206 = vmul.f32 %v199, 1.442695
    %v207 = vpow.pop %v206
    %v208 = vadd.f32 %v201, 1.0
    %v209 = vadd.f32 %v203, 1.0
    %v210 = vadd.f32 %v205, 1.0
    %v211 = vadd.f32 %v207, 1.0
    %v212 = vrcp.pop %v208
    %v213 = vmul.f32 1.0, %v212
    %v214 = vrcp.pop %v209
    %v215 = vmul.f32 1.0, %v214
    %v216 = vrcp.pop %v210
    %v217 = vmul.f32 1.0, %v216
    %v218 = vrcp.pop %v211
    %v219 = vmul.f32 1.0, %v218
    %220 = vst [vmem:[#allocation2] sm:$0xff] %v213
    %221 = vst [vmem:[#allocation2 + $0x8] sm:$0xff] %v215
    %222 = vst [vmem:[#allocation2 + $0x10] sm:$0xff] %v217
    %223 = vst [vmem:[#allocation2 + $0x18] sm:$0xff] %v219
    %v224 = vld [vmem:[#allocation3] sm:$0xff]
    %v225 = vld [vmem:[#allocation4] sm:$0xff]
    %v226 = vld [vmem:[#allocation5] sm:$0xff]
    %v227 = vadd.f32 %v224, %v226
    %vm228 = vcmp.ge.f32.partialorder %v227, 1.0
    %v229 = vld [vmem:[#allocation2] sm:$0xff]
    %v230 = vmul.f32 %v229, %v225
    %v231 = vsel %vm228, 1.0, 0.0
    %v232 = vadd.f32 %v230, %v231
    %v233 = vmul.f32 %v227, 0.0
    %v234 = vsel %vm228, %v233, %v227
    %235 = vst [vmem:[#allocation13] sm:$0xff] %v232
    %s236 = scalar_lea.vmem [#allocation5], 8
    %v237 = vld [vmem:[%s236] sm:$0xff]
    %v238 = vadd.f32 %v234, %v237
    %vm239 = vcmp.ge.f32.partialorder %v238, 1.0
    %s240 = scalar_lea.vmem [#allocation2], 8
    %v241 = vld [vmem:[%s240] sm:$0xff]
    %v242 = vmul.f32 %v241, %v232
    %v243 = vsel %vm239, 1.0, 0.0
    %v244 = vadd.f32 %v242, %v243
    %v245 = vmul.f32 %v238, 0.0
    %v246 = vsel %vm239, %v245, %v238
    %s247 = scalar_lea.vmem [#allocation13], 8
    %248 = vst [vmem:[%s247] sm:$0xff] %v244
    %s249 = scalar_lea.vmem [#allocation5], 16
    %v250 = vld [vmem:[%s249] sm:$0xff]
    %v251 = vadd.f32 %v246, %v250
    %vm252 = vcmp.ge.f32.partialorder %v251, 1.0
    %s253 = scalar_lea.vmem [#allocation2], 16
    %v254 = vld [vmem:[%s253] sm:$0xff]
    %v255 = vmul.f32 %v254, %v244
    %v256 = vsel %vm252, 1.0, 0.0
    %v257 = vadd.f32 %v255, %v256
    %v258 = vmul.f32 %v251, 0.0
    %v259 = vsel %vm252, %v258, %v251
    %s260 = scalar_lea.vmem [#allocation13], 16
    %261 = vst [vmem:[%s260] sm:$0xff] %v257
    %s262 = scalar_lea.vmem [#allocation5], 24
    %v263 = vld [vmem:[%s262] sm:$0xff]
    %v264 = vadd.f32 %v259, %v263
    %vm265 = vcmp.ge.f32.partialorder %v264, 1.0
    %s266 = scalar_lea.vmem [#allocation2], 24
    %v267 = vld [vmem:[%s266] sm:$0xff]
    %v268 = vmul.f32 %v267, %v257
    %v269 = vsel %vm265, 1.0, 0.0
    %v270 = vadd.f32 %v268, %v269
    %v271 = vmul.f32 %v264, 0.0
    %v272 = vsel %vm265, %v271, %v264
    %s273 = scalar_lea.vmem [#allocation13], 24
    %274 = vst [vmem:[%s273] sm:$0xff] %v270
    %275 = vst [vmem:[#allocation3] sm:$0xff] %v272
    %276 = vst [vmem:[#allocation4] sm:$0xff] %v270
    // Predicated region
    $region42: #{tpu_custom_call.1} parent=1 // pred_check
      %p277 = pneg %p76
    $region43: #{tpu_custom_call.1} parent=1 // pred_check_branch
      %279 = sbr.rel (%p277) target = $region45
    $region44: #{tpu_custom_call.1} parent=1 // pred_region
      %280 = vst [vmem:[#allocation14] sm:$0xff] %v272
      %281 = vst [vmem:[#allocation16] sm:$0xff] %v270
    $region45: #{tpu_custom_call.1} parent=1 // pred_fallthru
      _
    // Predicated region
    $region46: #{tpu_custom_call.1} parent=1 // pred_check
      _
    $region47: #{tpu_custom_call.1} parent=1 // pred_check_branch
      %283 = sbr.rel (0) target = $region49
    $region48: #{tpu_custom_call.1} parent=1 // pred_region
      %s285 = ssub.s32 512, 512
      %286 = vsyncadd [#allocation7], %s285
      %s287 = sshll.u32 [#allocation13], 4
      %s288 = int_to_ptr.vmem [resolvable:$true] %s287
      %293 = dma.vmem_to_hbm [thread:$0]  %s288, 512, %s5, [#allocation7], 128, 128, 8
    $region49: #{tpu_custom_call.1} parent=1 // pred_fallthru
      _
    // Predicated region
    $region50: #{tpu_custom_call.1} parent=1 // pred_check
      _
    $region51: #{tpu_custom_call.1} parent=1 // pred_check_branch
      %295 = sbr.rel (0) target = $region53
    $region52: #{tpu_custom_call.1} parent=1 // pred_region
      %s297 = ssub.s32 128, 128
      %298 = vsyncadd [#allocation15], %s297
      %s300 = sshll.u32 [#allocation14], 4
      %s301 = int_to_ptr.vmem [resolvable:$true] %s300
      %303 = dma.vmem_to_hbm [thread:$0]  %s301, 128, %s6, [#allocation15]
    $region53: #{tpu_custom_call.1} parent=1 // pred_fallthru
      _
    // Predicated region
    $region54: #{tpu_custom_call.1} parent=1 // pred_check
      _
    $region55: #{tpu_custom_call.1} parent=1 // pred_check_branch
      %305 = sbr.rel (0) target = $region57
    $region56: #{tpu_custom_call.1} parent=1 // pred_region
      %s307 = ssub.s32 128, 128
      %308 = vsyncadd [#allocation15], %s307
      %s310 = sshll.u32 [#allocation16], 4
      %s311 = int_to_ptr.vmem [resolvable:$true] %s310
      %313 = dma.vmem_to_hbm [thread:$0]  %s311, 128, %s7, [#allocation15]
    $region57: #{tpu_custom_call.1} parent=1 // pred_fallthru
      _
    // Predicated region
    $region58: #{tpu_custom_call.1} parent=1 // pred_check
      _
    $region59: #{tpu_custom_call.1} parent=1 // pred_check_branch
      %315 = sbr.rel (0) target = $region61
    $region60: #{tpu_custom_call.1} parent=1 // pred_region
      %316 = dma.done [#allocation7], 512
    $region61: #{tpu_custom_call.1} parent=1 // pred_fallthru
      _
    // Predicated region
    $region62: #{tpu_custom_call.1} parent=1 // pred_check
      _
    $region63: #{tpu_custom_call.1} parent=1 // pred_check_branch
      %318 = sbr.rel (0) target = $region65
    $region64: #{tpu_custom_call.1} parent=1 // pred_region
      %319 = dma.done [#allocation15], 128
    $region65: #{tpu_custom_call.1} parent=1 // pred_fallthru
      _
    // Predicated region
    $region66: #{tpu_custom_call.1} parent=1 // pred_check
      _
    $region67: #{tpu_custom_call.1} parent=1 // pred_check_branch
      %321 = sbr.rel (0) target = $region69
    $region68: #{tpu_custom_call.1} parent=1 // pred_region
      %322 = dma.done [#allocation15], 128
    $region69: #{tpu_custom_call.1} parent=1 // pred_fallthru
      _
    %323 = vsyncpa [#allocation6], 1
    %324 = vsyncpa [#allocation9], 1
    %325 = vsyncpa [#allocation12], 1
    %326 = vsyncpa [#allocation7], 1
    %327 = vsyncpa [#allocation15], 1

</llo_original>
